<compile_context>
chip_gen: v7x
topology: tpu7x:2x2x1
jax: 0.10.0
libtpu: 0.0.40
codegen_flags: <defaults>
</compile_context>

<pallas_src>
import functools

import jax
import jax.numpy as jnp
from jax import lax
from jax.experimental import pallas as pl
from jax.experimental.pallas import tpu as pltpu

WINDOW = 5
LANE = 128


def _round_up(x, m):
    return (x + m - 1) // m * m


def tagger_kernel(ids_ref, emb_ref, w1_ref, b1_ref, w2_ref, b2_ref, out_ref):
    # ids_ref : (TB, 5)            int32 token ids for this batch tile
    # emb_ref : (5, V_pad, K_pad)  per-window gather tables (embedding placed at
    #                              cols [w*E, (w+1)*E), zeros elsewhere)
    # w1_ref  : (K_pad, H_pad)     linear1 weight, transposed + zero padded
    # b1_ref  : (1, H_pad)         zero-padded bias
    # w2_ref  : (H_pad, T_pad)     linear2 weight, transposed + zero padded
    # b2_ref  : (1, T_pad)         real bias in [:T], -1e30 in padded tag lanes
    # out_ref : (TB, T_pad)        softmax probabilities (padded lanes == 0)
    tb = ids_ref.shape[0]
    v_pad = emb_ref.shape[1]

    ids = ids_ref[...]                                        # (TB, 5) int32
    iota = lax.broadcasted_iota(jnp.int32, (tb, v_pad), 1)    # lane index

    # Fused embedding gather + flatten + pad: x[b, w*E:(w+1)*E] = emb[ids[b, w]]
    # implemented as one-hot @ table on the MXU (exact: 0/1 weights).
    x = None
    for w in range(WINDOW):
        oh = (iota == ids[:, w:w + 1]).astype(jnp.float32)    # (TB, V_pad)
        gw = jnp.dot(oh, emb_ref[w], preferred_element_type=jnp.float32)
        x = gw if x is None else x + gw                       # (TB, K_pad)

    h = jnp.tanh(
        jnp.dot(x, w1_ref[...], preferred_element_type=jnp.float32) + b1_ref[...]
    )                                                         # (TB, H_pad)
    logits = (
        jnp.dot(h, w2_ref[...], preferred_element_type=jnp.float32) + b2_ref[...]
    )                                                         # (TB, T_pad)

    # Numerically-stable softmax over the tag axis; padded lanes hold -1e30 so
    # exp underflows to exactly 0 and the denominator is unchanged.  Exact
    # divide (approx reciprocal broke the 1e-4 tolerance).
    m = jnp.max(logits, axis=-1, keepdims=True)
    e = jnp.exp(logits - m)
    denom = jnp.sum(e, axis=-1, keepdims=True)
    out_ref[...] = (e / denom).astype(out_ref.dtype)


def prepare_params(embedding, w1, b1, w2, b2):
    """One-time parameter prep: transpose + zero-pad to lane-dense shapes."""
    V, E = embedding.shape
    H, K = w1.shape
    T = w2.shape[0]
    assert K == WINDOW * E

    V_pad = _round_up(V, LANE)
    K_pad = _round_up(K, LANE)
    H_pad = _round_up(H, LANE)
    T_pad = _round_up(T, LANE)

    emb_f32 = embedding.astype(jnp.float32)
    emb_tab = jnp.zeros((WINDOW, V_pad, K_pad), jnp.float32)
    for w in range(WINDOW):
        emb_tab = emb_tab.at[w, :V, w * E:(w + 1) * E].set(emb_f32)

    w1_p = jnp.zeros((K_pad, H_pad), jnp.float32).at[:K, :H].set(
        w1.T.astype(jnp.float32))
    b1_p = jnp.zeros((1, H_pad), jnp.float32).at[0, :H].set(b1.astype(jnp.float32))
    w2_p = jnp.zeros((H_pad, T_pad), jnp.float32).at[:H, :T].set(
        w2.T.astype(jnp.float32))
    # Padded tag lanes biased to -1e30 so softmax over 128 lanes is exact.
    b2_p = jnp.full((1, T_pad), -1e30, jnp.float32).at[0, :T].set(
        b2.astype(jnp.float32))
    return emb_tab, w1_p, b1_p, w2_p, b2_p


def window_base_tagger_forward(inputs, emb_tab, w1_p, b1_p, w2_p, b2_p,
                               *, tagset_size):
    """inputs: (B, 5) integer token ids. Returns (B, tagset_size) f32 probs."""
    B = inputs.shape[0]
    _, V_pad, K_pad = emb_tab.shape
    H_pad = w1_p.shape[1]
    T_pad = w2_p.shape[1]

    # Batch tile: multiple of 8 sublanes, capped so VMEM use stays O(TB).
    TB = min(128, _round_up(B, 8))
    B_pad = _round_up(B, TB)

    ids = inputs.astype(jnp.int32)
    if B_pad != B:
        ids = jnp.pad(ids, ((0, B_pad - B), (0, 0)))          # pad rows -> token 0

    grid = (B_pad // TB,)

    flops = B_pad * (WINDOW * 2 * V_pad * K_pad
                     + 2 * K_pad * H_pad
                     + 2 * H_pad * T_pad)
    transcendentals = B_pad * (H_pad + T_pad)                  # tanh + exp
    bytes_accessed = (
        B_pad * WINDOW * 4
        + (WINDOW * V_pad * K_pad + K_pad * H_pad + H_pad
           + H_pad * T_pad + T_pad) * 4
        + B_pad * T_pad * 4
    )

    out_padded = pl.pallas_call(
        tagger_kernel,
        out_shape=jax.ShapeDtypeStruct((B_pad, T_pad), jnp.float32),
        grid=grid,
        in_specs=[
            pl.BlockSpec((TB, WINDOW), lambda i: (i, 0)),               # ids
            pl.BlockSpec((WINDOW, V_pad, K_pad), lambda i: (0, 0, 0)),  # tables
            pl.BlockSpec((K_pad, H_pad), lambda i: (0, 0)),             # W1^T
            pl.BlockSpec((1, H_pad), lambda i: (0, 0)),                 # b1
            pl.BlockSpec((H_pad, T_pad), lambda i: (0, 0)),             # W2^T
            pl.BlockSpec((1, T_pad), lambda i: (0, 0)),                 # b2
        ],
        out_specs=pl.BlockSpec((TB, T_pad), lambda i: (i, 0)),
        compiler_params=pltpu.CompilerParams(
            dimension_semantics=("parallel",),
        ),
        cost_estimate=pl.CostEstimate(
            flops=flops,
            transcendentals=transcendentals,
            bytes_accessed=bytes_accessed,
        ),
    )(ids, emb_tab, w1_p, b1_p, w2_p, b2_p)

    return out_padded[:B, :tagset_size]


def init_params(key, vocab_size, embedding_dim, hidden_dim, tagset_size):
    """Deterministic synthetic parameters matching the PyTorch module's shapes."""
    k_emb, k_w1, k_b1, k_w2, k_b2 = jax.random.split(key, 5)
    in1 = 5 * embedding_dim
    lim1 = 1.0 / jnp.sqrt(in1)
    lim2 = 1.0 / jnp.sqrt(hidden_dim)
    embedding = jax.random.normal(k_emb, (vocab_size, embedding_dim), jnp.float32)
    w1 = jax.random.uniform(k_w1, (hidden_dim, in1), jnp.float32, -lim1, lim1)
    b1 = jax.random.uniform(k_b1, (hidden_dim,), jnp.float32, -lim1, lim1)
    w2 = jax.random.uniform(k_w2, (tagset_size, hidden_dim), jnp.float32, -lim2, lim2)
    b2 = jax.random.uniform(k_b2, (tagset_size,), jnp.float32, -lim2, lim2)
    return embedding, w1, b1, w2, b2


if __name__ == "__main__":
    vocab_size, embedding_dim, hidden_dim, tagset_size = 100, 16, 32, 8
    batch = 8  # batch of 5-token windows

    key = jax.random.PRNGKey(0)
    k_params, k_inputs = jax.random.split(key)
    embedding, w1, b1, w2, b2 = init_params(
        k_params, vocab_size, embedding_dim, hidden_dim, tagset_size
    )
    inputs = jax.random.randint(k_inputs, (batch, 5), 0, vocab_size, jnp.int32)

    # One-time param prep (transpose + lane-dense padding + gather tables).
    params = prepare_params(embedding, w1, b1, w2, b2)

    fwd = jax.jit(functools.partial(window_base_tagger_forward,
                                    tagset_size=tagset_size))
    probs = fwd(inputs, *params)
    probs = jax.block_until_ready(probs)

    # Pure-JAX reference (PyTorch semantics).
    x_ref = jnp.take(embedding, inputs, axis=0).reshape(batch, 5 * embedding_dim)
    h_ref = jnp.tanh(x_ref @ w1.T + b1)
    logits_ref = h_ref @ w2.T + b2
    probs_ref = jax.nn.softmax(logits_ref, axis=1)

    assert probs.shape == (batch, tagset_size)
    max_err = float(jnp.max(jnp.abs(probs - probs_ref)))
    assert jnp.allclose(probs, probs_ref, atol=1e-4, rtol=1e-4), max_err

    print("KERNEL_OK")
</pallas_src>

<mosaic_0001>
module attributes {stable_mosaic.version = 11 : i64} {
  func.func @tagger_kernel(%arg0: i32, %arg1: memref<8x5xi32, #tpu.memory_space<vmem>>, %arg2: memref<5x128x128xf32, #tpu.memory_space<vmem>>, %arg3: memref<128x128xf32, #tpu.memory_space<vmem>>, %arg4: memref<1x128xf32, #tpu.memory_space<vmem>>, %arg5: memref<128x128xf32, #tpu.memory_space<vmem>>, %arg6: memref<1x128xf32, #tpu.memory_space<vmem>>, %arg7: memref<8x128xf32, #tpu.memory_space<vmem>>) attributes {dimension_semantics = [#tpu.dimension_semantics<parallel>], iteration_bounds = array<i64: 1>, scalar_prefetch = 0 : i64, scratch_operands = 0 : i64, tpu.core_type = #tpu.core_type<tc>, window_params = [{transform_indices = @transform_0, window_bounds = array<i64: 8, 5>}, {pipeline_mode = #tpu.pipeline_mode<synchronous>, transform_indices = @transform_1, window_bounds = array<i64: 5, 128, 128>}, {pipeline_mode = #tpu.pipeline_mode<synchronous>, transform_indices = @transform_2, window_bounds = array<i64: 128, 128>}, {pipeline_mode = #tpu.pipeline_mode<synchronous>, transform_indices = @transform_3, window_bounds = array<i64: 1, 128>}, {pipeline_mode = #tpu.pipeline_mode<synchronous>, transform_indices = @transform_4, window_bounds = array<i64: 128, 128>}, {pipeline_mode = #tpu.pipeline_mode<synchronous>, transform_indices = @transform_5, window_bounds = array<i64: 1, 128>}, {transform_indices = @transform_6, window_bounds = array<i64: 8, 128>}]} {
    %c0 = arith.constant 0 : index
    %c0_0 = arith.constant 0 : index
    %0 = vector.load %arg1[%c0, %c0_0] : memref<8x5xi32, #tpu.memory_space<vmem>>, vector<8x5xi32>
    %1 = tpu.iota {dimensions = array<i32: 1>} : vector<8x128xi32>
    %2 = vector.extract_strided_slice %0 {offsets = [0, 0], sizes = [8, 1], strides = [1, 1]} : vector<8x5xi32> to vector<8x1xi32>
    %3 = vector.broadcast %2 : vector<8x1xi32> to vector<8x128xi32>
    %4 = arith.cmpi eq, %1, %3 : vector<8x128xi32>
    %5 = arith.extui %4 : vector<8x128xi1> to vector<8x128xi32>
    %6 = arith.sitofp %5 : vector<8x128xi32> to vector<8x128xf32>
    %c0_1 = arith.constant 0 : index
    %c0_2 = arith.constant 0 : index
    %c0_3 = arith.constant 0 : index
    %7 = vector.load %arg2[%c0_1, %c0_2, %c0_3] : memref<5x128x128xf32, #tpu.memory_space<vmem>>, vector<1x128x128xf32>
    %8 = vector.shape_cast %7 : vector<1x128x128xf32> to vector<128x128xf32>
    %cst = arith.constant dense<0.000000e+00> : vector<8x128xf32>
    %9 = tpu.matmul %6, %8, %cst {dimension_numbers = #tpu.dot_dimension_numbers<[1], [0], [0], [1], [0, 0, 1, 1], [], []>} : vector<8x128xf32>, vector<128x128xf32>, vector<8x128xf32> -> vector<8x128xf32>
    %10 = vector.extract_strided_slice %0 {offsets = [0, 1], sizes = [8, 1], strides = [1, 1]} : vector<8x5xi32> to vector<8x1xi32>
    %11 = vector.broadcast %10 : vector<8x1xi32> to vector<8x128xi32>
    %12 = arith.cmpi eq, %1, %11 : vector<8x128xi32>
    %13 = arith.extui %12 : vector<8x128xi1> to vector<8x128xi32>
    %14 = arith.sitofp %13 : vector<8x128xi32> to vector<8x128xf32>
    %c1 = arith.constant 1 : index
    %c0_4 = arith.constant 0 : index
    %c0_5 = arith.constant 0 : index
    %15 = vector.load %arg2[%c1, %c0_4, %c0_5] : memref<5x128x128xf32, #tpu.memory_space<vmem>>, vector<1x128x128xf32>
    %16 = vector.shape_cast %15 : vector<1x128x128xf32> to vector<128x128xf32>
    %cst_6 = arith.constant dense<0.000000e+00> : vector<8x128xf32>
    %17 = tpu.matmul %14, %16, %cst_6 {dimension_numbers = #tpu.dot_dimension_numbers<[1], [0], [0], [1], [0, 0, 1, 1], [], []>} : vector<8x128xf32>, vector<128x128xf32>, vector<8x128xf32> -> vector<8x128xf32>
    %18 = arith.addf %9, %17 : vector<8x128xf32>
    %19 = vector.extract_strided_slice %0 {offsets = [0, 2], sizes = [8, 1], strides = [1, 1]} : vector<8x5xi32> to vector<8x1xi32>
    %20 = vector.broadcast %19 : vector<8x1xi32> to vector<8x128xi32>
    %21 = arith.cmpi eq, %1, %20 : vector<8x128xi32>
    %22 = arith.extui %21 : vector<8x128xi1> to vector<8x128xi32>
    %23 = arith.sitofp %22 : vector<8x128xi32> to vector<8x128xf32>
    %c2 = arith.constant 2 : index
    %c0_7 = arith.constant 0 : index
    %c0_8 = arith.constant 0 : index
    %24 = vector.load %arg2[%c2, %c0_7, %c0_8] : memref<5x128x128xf32, #tpu.memory_space<vmem>>, vector<1x128x128xf32>
    %25 = vector.shape_cast %24 : vector<1x128x128xf32> to vector<128x128xf32>
    %cst_9 = arith.constant dense<0.000000e+00> : vector<8x128xf32>
    %26 = tpu.matmul %23, %25, %cst_9 {dimension_numbers = #tpu.dot_dimension_numbers<[1], [0], [0], [1], [0, 0, 1, 1], [], []>} : vector<8x128xf32>, vector<128x128xf32>, vector<8x128xf32> -> vector<8x128xf32>
    %27 = arith.addf %18, %26 : vector<8x128xf32>
    %28 = vector.extract_strided_slice %0 {offsets = [0, 3], sizes = [8, 1], strides = [1, 1]} : vector<8x5xi32> to vector<8x1xi32>
    %29 = vector.broadcast %28 : vector<8x1xi32> to vector<8x128xi32>
    %30 = arith.cmpi eq, %1, %29 : vector<8x128xi32>
    %31 = arith.extui %30 : vector<8x128xi1> to vector<8x128xi32>
    %32 = arith.sitofp %31 : vector<8x128xi32> to vector<8x128xf32>
    %c3 = arith.constant 3 : index
    %c0_10 = arith.constant 0 : index
    %c0_11 = arith.constant 0 : index
    %33 = vector.load %arg2[%c3, %c0_10, %c0_11] : memref<5x128x128xf32, #tpu.memory_space<vmem>>, vector<1x128x128xf32>
    %34 = vector.shape_cast %33 : vector<1x128x128xf32> to vector<128x128xf32>
    %cst_12 = arith.constant dense<0.000000e+00> : vector<8x128xf32>
    %35 = tpu.matmul %32, %34, %cst_12 {dimension_numbers = #tpu.dot_dimension_numbers<[1], [0], [0], [1], [0, 0, 1, 1], [], []>} : vector<8x128xf32>, vector<128x128xf32>, vector<8x128xf32> -> vector<8x128xf32>
    %36 = arith.addf %27, %35 : vector<8x128xf32>
    %37 = vector.extract_strided_slice %0 {offsets = [0, 4], sizes = [8, 1], strides = [1, 1]} : vector<8x5xi32> to vector<8x1xi32>
    %38 = vector.broadcast %37 : vector<8x1xi32> to vector<8x128xi32>
    %39 = arith.cmpi eq, %1, %38 : vector<8x128xi32>
    %40 = arith.extui %39 : vector<8x128xi1> to vector<8x128xi32>
    %41 = arith.sitofp %40 : vector<8x128xi32> to vector<8x128xf32>
    %c4 = arith.constant 4 : index
    %c0_13 = arith.constant 0 : index
    %c0_14 = arith.constant 0 : index
    %42 = vector.load %arg2[%c4, %c0_13, %c0_14] : memref<5x128x128xf32, #tpu.memory_space<vmem>>, vector<1x128x128xf32>
    %43 = vector.shape_cast %42 : vector<1x128x128xf32> to vector<128x128xf32>
    %cst_15 = arith.constant dense<0.000000e+00> : vector<8x128xf32>
    %44 = tpu.matmul %41, %43, %cst_15 {dimension_numbers = #tpu.dot_dimension_numbers<[1], [0], [0], [1], [0, 0, 1, 1], [], []>} : vector<8x128xf32>, vector<128x128xf32>, vector<8x128xf32> -> vector<8x128xf32>
    %45 = arith.addf %36, %44 : vector<8x128xf32>
    %c0_16 = arith.constant 0 : index
    %c0_17 = arith.constant 0 : index
    %46 = vector.load %arg3[%c0_16, %c0_17] : memref<128x128xf32, #tpu.memory_space<vmem>>, vector<128x128xf32>
    %cst_18 = arith.constant dense<0.000000e+00> : vector<8x128xf32>
    %47 = tpu.matmul %45, %46, %cst_18 {dimension_numbers = #tpu.dot_dimension_numbers<[1], [0], [0], [1], [0, 0, 1, 1], [], []>} : vector<8x128xf32>, vector<128x128xf32>, vector<8x128xf32> -> vector<8x128xf32>
    %c0_19 = arith.constant 0 : index
    %c0_20 = arith.constant 0 : index
    %48 = vector.load %arg4[%c0_19, %c0_20] : memref<1x128xf32, #tpu.memory_space<vmem>>, vector<1x128xf32>
    %49 = vector.broadcast %48 : vector<1x128xf32> to vector<8x128xf32>
    %50 = arith.addf %47, %49 : vector<8x128xf32>
    %51 = math.tanh %50 : vector<8x128xf32>
    %c0_21 = arith.constant 0 : index
    %c0_22 = arith.constant 0 : index
    %52 = vector.load %arg5[%c0_21, %c0_22] : memref<128x128xf32, #tpu.memory_space<vmem>>, vector<128x128xf32>
    %cst_23 = arith.constant dense<0.000000e+00> : vector<8x128xf32>
    %53 = tpu.matmul %51, %52, %cst_23 {dimension_numbers = #tpu.dot_dimension_numbers<[1], [0], [0], [1], [0, 0, 1, 1], [], []>} : vector<8x128xf32>, vector<128x128xf32>, vector<8x128xf32> -> vector<8x128xf32>
    %c0_24 = arith.constant 0 : index
    %c0_25 = arith.constant 0 : index
    %54 = vector.load %arg6[%c0_24, %c0_25] : memref<1x128xf32, #tpu.memory_space<vmem>>, vector<1x128xf32>
    %55 = vector.broadcast %54 : vector<1x128xf32> to vector<8x128xf32>
    %56 = arith.addf %53, %55 : vector<8x128xf32>
    %cst_26 = arith.constant dense<0xFF800000> : vector<8xf32>
    %57 = vector.multi_reduction <maximumf>, %56, %cst_26 [1] : vector<8x128xf32> to vector<8xf32>
    %58 = vector.shape_cast %57 : vector<8xf32> to vector<8x1xf32>
    %59 = vector.broadcast %58 : vector<8x1xf32> to vector<8x128xf32>
    %60 = arith.subf %56, %59 : vector<8x128xf32>
    %61 = math.exp %60 : vector<8x128xf32>
    %cst_27 = arith.constant dense<0.000000e+00> : vector<8xf32>
    %62 = vector.multi_reduction <add>, %61, %cst_27 [1] : vector<8x128xf32> to vector<8xf32>
    %63 = vector.shape_cast %62 : vector<8xf32> to vector<8x1xf32>
    %64 = vector.broadcast %63 : vector<8x1xf32> to vector<8x128xf32>
    %65 = arith.divf %61, %64 : vector<8x128xf32>
    %c0_28 = arith.constant 0 : index
    %c0_29 = arith.constant 0 : index
    %66 = vector.load %arg7[%c0_28, %c0_29] : memref<8x128xf32, #tpu.memory_space<vmem>>, vector<8x128xf32>
    tpu.vector_store %arg7[%c0_28, %c0_29], %65 {strides = array<i32>} : memref<8x128xf32, #tpu.memory_space<vmem>>, vector<8x128xf32>,
    return
  }
  func.func @transform_0(%arg0: i32) -> (i32, i32) {
    %c0_i32 = arith.constant 0 : i32
    %c0_i32_0 = arith.constant 0 : i32
    return %arg0, %c0_i32 : i32, i32
  }
  func.func @transform_1(%arg0: i32) -> (i32, i32, i32) {
    %c0_i32 = arith.constant 0 : i32
    %c0_i32_0 = arith.constant 0 : i32
    %c0_i32_1 = arith.constant 0 : i32
    %c0_i32_2 = arith.constant 0 : i32
    return %c0_i32, %c0_i32_0, %c0_i32_1 : i32, i32, i32
  }
  func.func @transform_2(%arg0: i32) -> (i32, i32) {
    %c0_i32 = arith.constant 0 : i32
    %c0_i32_0 = arith.constant 0 : i32
    %c0_i32_1 = arith.constant 0 : i32
    return %c0_i32, %c0_i32_0 : i32, i32
  }
  func.func @transform_3(%arg0: i32) -> (i32, i32) {
    %c0_i32 = arith.constant 0 : i32
    %c0_i32_0 = arith.constant 0 : i32
    %c0_i32_1 = arith.constant 0 : i32
    return %c0_i32, %c0_i32_0 : i32, i32
  }
  func.func @transform_4(%arg0: i32) -> (i32, i32) {
    %c0_i32 = arith.constant 0 : i32
    %c0_i32_0 = arith.constant 0 : i32
    %c0_i32_1 = arith.constant 0 : i32
    return %c0_i32, %c0_i32_0 : i32, i32
  }
  func.func @transform_5(%arg0: i32) -> (i32, i32) {
    %c0_i32 = arith.constant 0 : i32
    %c0_i32_0 = arith.constant 0 : i32
    %c0_i32_1 = arith.constant 0 : i32
    return %c0_i32, %c0_i32_0 : i32, i32
  }
  func.func @transform_6(%arg0: i32) -> (i32, i32) {
    %c0_i32 = arith.constant 0 : i32
    %c0_i32_0 = arith.constant 0 : i32
    return %arg0, %c0_i32 : i32, i32
  }
}

</mosaic_0001>

<llo_original>
// kernel: window_base_tagger_forward.1
$region0: #{window_base_tagger_forward.1}
  #allocation0 [shape = 'u32[]', space=smem, size = 0x4, offset = 0x4, fixed_abs, tag = 'smem constant byte address 0x4 - core index']
  #allocation1 [shape = 'u32[144,128]{1,0:T(1,128)}', space=vmem, size = 0x12000, scoped, tag = 'internal scratch']
  %s0 = inlined_call_operand.hbm [shape: s32[8,5], index: 0, kind: input, shape index: {}]
  %s1 = inlined_call_operand.hbm [shape: f32[5,128,128], index: 1, kind: input, shape index: {}]
  %s2 = inlined_call_operand.hbm [shape: f32[128,128], index: 2, kind: input, shape index: {}]
  %s3 = inlined_call_operand.vmem [shape: f32[1,128], index: 3, kind: input, shape index: {}]
  %s4 = inlined_call_operand.hbm [shape: f32[128,128], index: 4, kind: input, shape index: {}]
  %s5 = inlined_call_operand.vmem [shape: f32[1,128], index: 5, kind: input, shape index: {}]
  %s6 = inlined_call_operand.hbm [shape: f32[8,128], index: 6, kind: output, shape index: {}]
  %s7 = sld [smem:[#allocation0]]
  $region50: #{window_base_tagger_forward.1} parent=0
    _
  %s9 = ssub.s32 1, %s7
  %s10 = scalar_select 0, %s9, %s7
  $region1: #{window_base_tagger_forward.1} parent=0
    #allocation2 [shape = 'u8[4096]{0}', space=vmem, size = 0x1000, scoped, tag = 'input window, operand 0, single buffered']
    #allocation3 [shape = 's32[1]{0}', space=sflag, size = 0x4, scoped, tag = 'scoped memory for window_base_tagger_forward.1']
    #allocation4 [shape = 's32[1]{0}', space=sflag, size = 0x4, scoped, tag = 'scoped memory for window_base_tagger_forward.1']
    #allocation5 [shape = 'u8[327680]{0}', space=vmem, size = 0x50000, scoped, tag = 'input window, operand 1, single buffered']
    #allocation6 [shape = 's32[1]{0}', space=sflag, size = 0x4, scoped, tag = 'scoped memory for window_base_tagger_forward.1']
    #allocation7 [shape = 'u8[65536]{0}', space=vmem, size = 0x10000, scoped, tag = 'input window, operand 2, single buffered']
    #allocation8 [shape = 'u8[65536]{0}', space=vmem, size = 0x10000, scoped, tag = 'input window, operand 4, single buffered']
    #allocation9 [shape = 's32[1]{0}', space=sflag, size = 0x4, scoped, tag = 'scoped memory for window_base_tagger_forward.1']
    #allocation10 [shape = 'u8[4096]{0}', space=vmem, size = 0x1000, scoped, tag = 'output window, operand 0, single buffered']
    %11 = vsyncpa [#allocation3], 0
    %12 = vsyncpa [#allocation6], 0
    %13 = vsyncpa [#allocation9], 0
    %14 = vsyncpa [#allocation4], 0
    // Predicated region
    $region2: #{window_base_tagger_forward.1} parent=1 // pred_check
      _
    $region3: #{window_base_tagger_forward.1} parent=1 // pred_check_branch
      %16 = sbr.rel (0) target = $region5
    $region4: #{window_base_tagger_forward.1} parent=1 // pred_region
      %s18 = ssub.s32 128, 128
      %19 = vsyncadd [#allocation3], %s18
      %s21 = sshll.u32 [#allocation2], 4
      %s22 = int_to_ptr.vmem [resolvable:$true] %s21
      %24 = dma.hbm_to_vmem [thread:$0]  %s0, 128, %s22, [#allocation3]
    $region5: #{window_base_tagger_forward.1} parent=1 // pred_fallthru
      _
    // Predicated region
    $region6: #{window_base_tagger_forward.1} parent=1 // pred_check
      _
    $region7: #{window_base_tagger_forward.1} parent=1 // pred_check_branch
      %26 = sbr.rel (0) target = $region9
    $region8: #{window_base_tagger_forward.1} parent=1 // pred_region
      %s28 = ssub.s32 10240, 10240
      %29 = vsyncadd [#allocation6], %s28
      %s30 = sshll.u32 [#allocation5], 4
      %s31 = int_to_ptr.vmem [resolvable:$true] %s30
      %36 = dma.hbm_to_vmem [thread:$0]  %s1, 10240, %s31, [#allocation6], 128, 128, 8
    $region9: #{window_base_tagger_forward.1} parent=1 // pred_fallthru
      _
    // Predicated region
    $region10: #{window_base_tagger_forward.1} parent=1 // pred_check
      _
    $region11: #{window_base_tagger_forward.1} parent=1 // pred_check_branch
      %38 = sbr.rel (0) target = $region13
    $region12: #{window_base_tagger_forward.1} parent=1 // pred_region
      %s40 = ssub.s32 2048, 2048
      %41 = vsyncadd [#allocation6], %s40
      %s42 = sshll.u32 [#allocation7], 4
      %s43 = int_to_ptr.vmem [resolvable:$true] %s42
      %48 = dma.hbm_to_vmem [thread:$0]  %s2, 2048, %s43, [#allocation6], 128, 128, 8
    $region13: #{window_base_tagger_forward.1} parent=1 // pred_fallthru
      _
    // Predicated region
    $region14: #{window_base_tagger_forward.1} parent=1 // pred_check
      _
    $region15: #{window_base_tagger_forward.1} parent=1 // pred_check_branch
      %50 = sbr.rel (0) target = $region17
    $region16: #{window_base_tagger_forward.1} parent=1 // pred_region
      _
    $region17: #{window_base_tagger_forward.1} parent=1 // pred_fallthru
      _
    // Predicated region
    $region18: #{window_base_tagger_forward.1} parent=1 // pred_check
      _
    $region19: #{window_base_tagger_forward.1} parent=1 // pred_check_branch
      %52 = sbr.rel (0) target = $region21
    $region20: #{window_base_tagger_forward.1} parent=1 // pred_region
      %s54 = ssub.s32 2048, 2048
      %55 = vsyncadd [#allocation9], %s54
      %s56 = sshll.u32 [#allocation8], 4
      %s57 = int_to_ptr.vmem [resolvable:$true] %s56
      %62 = dma.hbm_to_vmem [thread:$0]  %s4, 2048, %s57, [#allocation9], 128, 128, 8
    $region21: #{window_base_tagger_forward.1} parent=1 // pred_fallthru
      _
    // Predicated region
    $region22: #{window_base_tagger_forward.1} parent=1 // pred_check
      _
    $region23: #{window_base_tagger_forward.1} parent=1 // pred_check_branch
      %64 = sbr.rel (0) target = $region25
    $region24: #{window_base_tagger_forward.1} parent=1 // pred_region
      _
    $region25: #{window_base_tagger_forward.1} parent=1 // pred_fallthru
      _
    // Predicated region
    $region26: #{window_base_tagger_forward.1} parent=1 // pred_check
      _
    $region27: #{window_base_tagger_forward.1} parent=1 // pred_check_branch
      %66 = sbr.rel (0) target = $region29
    $region28: #{window_base_tagger_forward.1} parent=1 // pred_region
      %67 = dma.done [#allocation3], 128
    $region29: #{window_base_tagger_forward.1} parent=1 // pred_fallthru
      _
    // Predicated region
    $region30: #{window_base_tagger_forward.1} parent=1 // pred_check
      _
    $region31: #{window_base_tagger_forward.1} parent=1 // pred_check_branch
      %69 = sbr.rel (0) target = $region33
    $region32: #{window_base_tagger_forward.1} parent=1 // pred_region
      %70 = dma.done [#allocation6], 10240
    $region33: #{window_base_tagger_forward.1} parent=1 // pred_fallthru
      _
    // Predicated region
    $region34: #{window_base_tagger_forward.1} parent=1 // pred_check
      _
    $region35: #{window_base_tagger_forward.1} parent=1 // pred_check_branch
      %72 = sbr.rel (0) target = $region37
    $region36: #{window_base_tagger_forward.1} parent=1 // pred_region
      %73 = dma.done [#allocation6], 2048
    $region37: #{window_base_tagger_forward.1} parent=1 // pred_fallthru
      _
    // Predicated region
    $region38: #{window_base_tagger_forward.1} parent=1 // pred_check
      _
    $region39: #{window_base_tagger_forward.1} parent=1 // pred_check_branch
      %75 = sbr.rel (0) target = $region41
    $region40: #{window_base_tagger_forward.1} parent=1 // pred_region
      %76 = dma.done [#allocation9], 2048
    $region41: #{window_base_tagger_forward.1} parent=1 // pred_fallthru
      _
    %v77 = vld [vmem:[#allocation2] sm:$0xff]
    %v78 = vlaneseq
    %v79 = vand.u32 %v78, 127
    %80 = vset.pattern.permute.xlu0 0
    %81 = vperm.xlu0 %80, %v77
    %v82 = vpop.permute.xlu0 %81
    %vm83 = vcmp.eq.s32.totalorder %v79, %v82
    %v84 = vsel %vm83, 1, 0
    %v85 = vcvt.s32.f32 %v84
    %v86 = vld [vmem:[#allocation5] sm:$0xff]
    %v87 = vld [vmem:[#allocation5 + $0x8] sm:$0xff]
    %v88 = vld [vmem:[#allocation5 + $0x10] sm:$0xff]
    %v89 = vld [vmem:[#allocation5 + $0x18] sm:$0xff]
    %v90 = vld [vmem:[#allocation5 + $0x20] sm:$0xff]
    %v91 = vld [vmem:[#allocation5 + $0x28] sm:$0xff]
    %v92 = vld [vmem:[#allocation5 + $0x30] sm:$0xff]
    %v93 = vld [vmem:[#allocation5 + $0x38] sm:$0xff]
    %v94 = vld [vmem:[#allocation5 + $0x40] sm:$0xff]
    %v95 = vld [vmem:[#allocation5 + $0x48] sm:$0xff]
    %v96 = vld [vmem:[#allocation5 + $0x50] sm:$0xff]
    %v97 = vld [vmem:[#allocation5 + $0x58] sm:$0xff]
    %v98 = vld [vmem:[#allocation5 + $0x60] sm:$0xff]
    %v99 = vld [vmem:[#allocation5 + $0x68] sm:$0xff]
    %v100 = vld [vmem:[#allocation5 + $0x70] sm:$0xff]
    %v101 = vld [vmem:[#allocation5 + $0x78] sm:$0xff]
    %102 = vset.pattern.permute.xlu0 1
    %103 = vperm.xlu0 %102, %v77
    %v104 = vpop.permute.xlu0 %103
    %vm105 = vcmp.eq.s32.totalorder %v79, %v104
    %v106 = vsel %vm105, 1, 0
    %v107 = vcvt.s32.f32 %v106
    %s108 = scalar_lea.vmem [#allocation5], 128
    %v109 = vld [vmem:[%s108] sm:$0xff]
    %v110 = vld [vmem:[%s108 + $0x8] sm:$0xff]
    %v111 = vld [vmem:[%s108 + $0x10] sm:$0xff]
    %v112 = vld [vmem:[%s108 + $0x18] sm:$0xff]
    %v113 = vld [vmem:[%s108 + $0x20] sm:$0xff]
    %v114 = vld [vmem:[%s108 + $0x28] sm:$0xff]
    %v115 = vld [vmem:[%s108 + $0x30] sm:$0xff]
    %v116 = vld [vmem:[%s108 + $0x38] sm:$0xff]
    %v117 = vld [vmem:[%s108 + $0x40] sm:$0xff]
    %v118 = vld [vmem:[%s108 + $0x48] sm:$0xff]
    %v119 = vld [vmem:[%s108 + $0x50] sm:$0xff]
    %v120 = vld [vmem:[%s108 + $0x58] sm:$0xff]
    %v121 = vld [vmem:[%s108 + $0x60] sm:$0xff]
    %v122 = vld [vmem:[%s108 + $0x68] sm:$0xff]
    %v123 = vld [vmem:[%s108 + $0x70] sm:$0xff]
    %v124 = vld [vmem:[%s108 + $0x78] sm:$0xff]
    %125 = vmatprep.subr.mxu0 0.0
    %126 = vmatpush1.msra.mxu0 %v109
    %127 = vmatprep.subr.mxu0 0.0
    %128 = vmatpush1.msra.mxu0 %v110
    %129 = vmatprep.subr.mxu0 0.0
    %130 = vmatpush1.msra.mxu0 %v111
    %131 = vmatprep.subr.mxu0 0.0
    %132 = vmatpush1.msra.mxu0 %v112
    %133 = vmatprep.subr.mxu0 0.0
    %134 = vmatpush1.msra.mxu0 %v113
    %135 = vmatprep.subr.mxu0 0.0
    %136 = vmatpush1.msra.mxu0 %v114
    %137 = vmatprep.subr.mxu0 0.0
    %138 = vmatpush1.msra.mxu0 %v115
    %139 = vmatprep.subr.mxu0 0.0
    %140 = vmatpush1.msra.mxu0 %v116
    %141 = vmatprep.subr.mxu0 0.0
    %142 = vmatpush1.msra.mxu0 %v117
    %143 = vmatprep.subr.mxu0 0.0
    %144 = vmatpush1.msra.mxu0 %v118
    %145 = vmatprep.subr.mxu0 0.0
    %146 = vmatpush1.msra.mxu0 %v119
    %147 = vmatprep.subr.mxu0 0.0
    %148 = vmatpush1.msra.mxu0 %v120
    %149 = vmatprep.subr.mxu0 0.0
    %150 = vmatpush1.msra.mxu0 %v121
    %151 = vmatprep.subr.mxu0 0.0
    %152 = vmatpush1.msra.mxu0 %v122
    %153 = vmatprep.subr.mxu0 0.0
    %154 = vmatpush1.msra.mxu0 %v123
    %155 = vmatprep.subr.mxu0 0.0
    %156 = vmatpush1.msra.mxu0 %v124
    %157 = vmatprep.subr.mxu0 0.0
    %158 = vmatpush1.msra.mxu0 0.0
    %159 = vmatprep.subr.mxu0 0.0
    %160 = vmatpush1.msra.mxu0 0.0
    %161 = vmatprep.subr.mxu0 0.0
    %162 = vmatpush1.msra.mxu0 0.0
    %163 = vmatprep.subr.mxu0 0.0
    %164 = vmatpush1.msra.mxu0 0.0
    %165 = vmatprep.subr.mxu0 0.0
    %166 = vmatpush1.msra.mxu0 0.0
    %167 = vmatprep.subr.mxu0 0.0
    %168 = vmatpush1.msra.mxu0 0.0
    %169 = vmatprep.subr.mxu0 0.0
    %170 = vmatpush1.msra.mxu0 0.0
    %171 = vmatprep.subr.mxu0 0.0
    %172 = vmatpush1.msra.mxu0 0.0
    %173 = vmatprep.subr.mxu0 0.0
    %174 = vmatpush1.msra.mxu0 0.0
    %175 = vmatprep.subr.mxu0 0.0
    %176 = vmatpush1.msra.mxu0 0.0
    %177 = vmatprep.subr.mxu0 0.0
    %178 = vmatpush1.msra.mxu0 0.0
    %179 = vmatprep.subr.mxu0 0.0
    %180 = vmatpush1.msra.mxu0 0.0
    %181 = vmatprep.subr.mxu0 0.0
    %182 = vmatpush1.msra.mxu0 0.0
    %183 = vmatprep.subr.mxu0 0.0
    %184 = vmatpush1.msra.mxu0 0.0
    %185 = vmatprep.subr.mxu0 0.0
    %186 = vmatpush1.msra.mxu0 0.0
    %187 = vmatprep.subr.mxu0 0.0
    %188 = vmatpush1.msra.mxu0 0.0
    %189 = vmatprep.mubr.f32.mxu0 0.0
    %190 = vmatmul.mubr.f32.gmra.mrb[0].mxu0 %v107
    %v191 = vpop.f32.mrb[0].mxu0
    %v192 = vadd.f32 0.0, %v191
    %v193 = vpop.f32.mrb[0].mxu0
    %194 = vdwg.mxu0
    %195 = vmatprep.subr.mxu0 0.0
    %196 = vmatpush1.msra.mxu0 %v86
    %197 = vmatprep.subr.mxu0 0.0
    %198 = vmatpush1.msra.mxu0 %v87
    %199 = vmatprep.subr.mxu0 0.0
    %200 = vmatpush1.msra.mxu0 %v88
    %201 = vmatprep.subr.mxu0 0.0
    %202 = vmatpush1.msra.mxu0 %v89
    %203 = vmatprep.subr.mxu0 0.0
    %204 = vmatpush1.msra.mxu0 %v90
    %205 = vmatprep.subr.mxu0 0.0
    %206 = vmatpush1.msra.mxu0 %v91
    %207 = vmatprep.subr.mxu0 0.0
    %208 = vmatpush1.msra.mxu0 %v92
    %209 = vmatprep.subr.mxu0 0.0
    %210 = vmatpush1.msra.mxu0 %v93
    %211 = vmatprep.subr.mxu0 0.0
    %212 = vmatpush1.msra.mxu0 %v94
    %213 = vmatprep.subr.mxu0 0.0
    %214 = vmatpush1.msra.mxu0 %v95
    %215 = vmatprep.subr.mxu0 0.0
    %216 = vmatpush1.msra.mxu0 %v96
    %217 = vmatprep.subr.mxu0 0.0
    %218 = vmatpush1.msra.mxu0 %v97
    %219 = vmatprep.subr.mxu0 0.0
    %220 = vmatpush1.msra.mxu0 %v98
    %221 = vmatprep.subr.mxu0 0.0
    %222 = vmatpush1.msra.mxu0 %v99
    %223 = vmatprep.subr.mxu0 0.0
    %224 = vmatpush1.msra.mxu0 %v100
    %225 = vmatprep.subr.mxu0 0.0
    %226 = vmatpush1.msra.mxu0 %v101
    %227 = vmatprep.subr.mxu0 0.0
    %228 = vmatpush1.msra.mxu0 0.0
    %229 = vmatprep.subr.mxu0 0.0
    %230 = vmatpush1.msra.mxu0 0.0
    %231 = vmatprep.subr.mxu0 0.0
    %232 = vmatpush1.msra.mxu0 0.0
    %233 = vmatprep.subr.mxu0 0.0
    %234 = vmatpush1.msra.mxu0 0.0
    %235 = vmatprep.subr.mxu0 0.0
    %236 = vmatpush1.msra.mxu0 0.0
    %237 = vmatprep.subr.mxu0 0.0
    %238 = vmatpush1.msra.mxu0 0.0
    %239 = vmatprep.subr.mxu0 0.0
    %240 = vmatpush1.msra.mxu0 0.0
    %241 = vmatprep.subr.mxu0 0.0
    %242 = vmatpush1.msra.mxu0 0.0
    %243 = vmatprep.subr.mxu0 0.0
    %244 = vmatpush1.msra.mxu0 0.0
    %245 = vmatprep.subr.mxu0 0.0
    %246 = vmatpush1.msra.mxu0 0.0
    %247 = vmatprep.subr.mxu0 0.0
    %248 = vmatpush1.msra.mxu0 0.0
    %249 = vmatprep.subr.mxu0 0.0
    %250 = vmatpush1.msra.mxu0 0.0
    %251 = vmatprep.subr.mxu0 0.0
    %252 = vmatpush1.msra.mxu0 0.0
    %253 = vmatprep.subr.mxu0 0.0
    %254 = vmatpush1.msra.mxu0 0.0
    %255 = vmatprep.subr.mxu0 0.0
    %256 = vmatpush1.msra.mxu0 0.0
    %257 = vmatprep.subr.mxu0 0.0
    %258 = vmatpush1.msra.mxu0 0.0
    %259 = vmatprep.mubr.f32.mxu0 0.0
    %260 = vmatmul.mubr.f32.gmra.mrb[0].mxu0 %v85
    %v261 = vpop.f32.mrb[0].mxu0
    %v262 = vadd.f32 %v192, %v261
    %v263 = vpop.f32.mrb[0].mxu0
    %264 = vdwg.mxu0
    %265 = vset.pattern.permute.xlu0 2
    %266 = vperm.xlu0 %265, %v77
    %v267 = vpop.permute.xlu0 %266
    %vm268 = vcmp.eq.s32.totalorder %v79, %v267
    %v269 = vsel %vm268, 1, 0
    %v270 = vcvt.s32.f32 %v269
    %s271 = scalar_lea.vmem [#allocation5], 256
    %v272 = vld [vmem:[%s271] sm:$0xff]
    %v273 = vld [vmem:[%s271 + $0x8] sm:$0xff]
    %v274 = vld [vmem:[%s271 + $0x10] sm:$0xff]
    %v275 = vld [vmem:[%s271 + $0x18] sm:$0xff]
    %v276 = vld [vmem:[%s271 + $0x20] sm:$0xff]
    %v277 = vld [vmem:[%s271 + $0x28] sm:$0xff]
    %v278 = vld [vmem:[%s271 + $0x30] sm:$0xff]
    %v279 = vld [vmem:[%s271 + $0x38] sm:$0xff]
    %v280 = vld [vmem:[%s271 + $0x40] sm:$0xff]
    %v281 = vld [vmem:[%s271 + $0x48] sm:$0xff]
    %v282 = vld [vmem:[%s271 + $0x50] sm:$0xff]
    %v283 = vld [vmem:[%s271 + $0x58] sm:$0xff]
    %v284 = vld [vmem:[%s271 + $0x60] sm:$0xff]
    %v285 = vld [vmem:[%s271 + $0x68] sm:$0xff]
    %v286 = vld [vmem:[%s271 + $0x70] sm:$0xff]
    %v287 = vld [vmem:[%s271 + $0x78] sm:$0xff]
    %288 = vmatprep.subr.mxu0 0.0
    %289 = vmatpush1.msra.mxu0 %v272
    %290 = vmatprep.subr.mxu0 0.0
    %291 = vmatpush1.msra.mxu0 %v273
    %292 = vmatprep.subr.mxu0 0.0
    %293 = vmatpush1.msra.mxu0 %v274
    %294 = vmatprep.subr.mxu0 0.0
    %295 = vmatpush1.msra.mxu0 %v275
    %296 = vmatprep.subr.mxu0 0.0
    %297 = vmatpush1.msra.mxu0 %v276
    %298 = vmatprep.subr.mxu0 0.0
    %299 = vmatpush1.msra.mxu0 %v277
    %300 = vmatprep.subr.mxu0 0.0
    %301 = vmatpush1.msra.mxu0 %v278
    %302 = vmatprep.subr.mxu0 0.0
    %303 = vmatpush1.msra.mxu0 %v279
    %304 = vmatprep.subr.mxu0 0.0
    %305 = vmatpush1.msra.mxu0 %v280
    %306 = vmatprep.subr.mxu0 0.0
    %307 = vmatpush1.msra.mxu0 %v281
    %308 = vmatprep.subr.mxu0 0.0
    %309 = vmatpush1.msra.mxu0 %v282
    %310 = vmatprep.subr.mxu0 0.0
    %311 = vmatpush1.msra.mxu0 %v283
    %312 = vmatprep.subr.mxu0 0.0
    %313 = vmatpush1.msra.mxu0 %v284
    %314 = vmatprep.subr.mxu0 0.0
    %315 = vmatpush1.msra.mxu0 %v285
    %316 = vmatprep.subr.mxu0 0.0
    %317 = vmatpush1.msra.mxu0 %v286
    %318 = vmatprep.subr.mxu0 0.0
    %319 = vmatpush1.msra.mxu0 %v287
    %320 = vmatprep.subr.mxu0 0.0
    %321 = vmatpush1.msra.mxu0 0.0
    %322 = vmatprep.subr.mxu0 0.0
    %323 = vmatpush1.msra.mxu0 0.0
    %324 = vmatprep.subr.mxu0 0.0
    %325 = vmatpush1.msra.mxu0 0.0
    %326 = vmatprep.subr.mxu0 0.0
    %327 = vmatpush1.msra.mxu0 0.0
    %328 = vmatprep.subr.mxu0 0.0
    %329 = vmatpush1.msra.mxu0 0.0
    %330 = vmatprep.subr.mxu0 0.0
    %331 = vmatpush1.msra.mxu0 0.0
    %332 = vmatprep.subr.mxu0 0.0
    %333 = vmatpush1.msra.mxu0 0.0
    %334 = vmatprep.subr.mxu0 0.0
    %335 = vmatpush1.msra.mxu0 0.0
    %336 = vmatprep.subr.mxu0 0.0
    %337 = vmatpush1.msra.mxu0 0.0
    %338 = vmatprep.subr.mxu0 0.0
    %339 = vmatpush1.msra.mxu0 0.0
    %340 = vmatprep.subr.mxu0 0.0
    %341 = vmatpush1.msra.mxu0 0.0
    %342 = vmatprep.subr.mxu0 0.0
    %343 = vmatpush1.msra.mxu0 0.0
    %344 = vmatprep.subr.mxu0 0.0
    %345 = vmatpush1.msra.mxu0 0.0
    %346 = vmatprep.subr.mxu0 0.0
    %347 = vmatpush1.msra.mxu0 0.0
    %348 = vmatprep.subr.mxu0 0.0
    %349 = vmatpush1.msra.mxu0 0.0
    %350 = vmatprep.subr.mxu0 0.0
    %351 = vmatpush1.msra.mxu0 0.0
    %352 = vmatprep.mubr.f32.mxu0 0.0
    %353 = vmatmul.mubr.f32.gmra.mrb[0].mxu0 %v270
    %v354 = vpop.f32.mrb[0].mxu0
    %v355 = vadd.f32 0.0, %v354
    %v356 = vpop.f32.mrb[0].mxu0
    %357 = vdwg.mxu0
    %v358 = vadd.f32 %v262, %v355
    %359 = vset.pattern.permute.xlu0 3
    %360 = vperm.xlu0 %359, %v77
    %v361 = vpop.permute.xlu0 %360
    %vm362 = vcmp.eq.s32.totalorder %v79, %v361
    %v363 = vsel %vm362, 1, 0
    %v364 = vcvt.s32.f32 %v363
    %s365 = scalar_lea.vmem [#allocation5], 384
    %v366 = vld [vmem:[%s365] sm:$0xff]
    %v367 = vld [vmem:[%s365 + $0x8] sm:$0xff]
    %v368 = vld [vmem:[%s365 + $0x10] sm:$0xff]
    %v369 = vld [vmem:[%s365 + $0x18] sm:$0xff]
    %v370 = vld [vmem:[%s365 + $0x20] sm:$0xff]
    %v371 = vld [vmem:[%s365 + $0x28] sm:$0xff]
    %v372 = vld [vmem:[%s365 + $0x30] sm:$0xff]
    %v373 = vld [vmem:[%s365 + $0x38] sm:$0xff]
    %v374 = vld [vmem:[%s365 + $0x40] sm:$0xff]
    %v375 = vld [vmem:[%s365 + $0x48] sm:$0xff]
    %v376 = vld [vmem:[%s365 + $0x50] sm:$0xff]
    %v377 = vld [vmem:[%s365 + $0x58] sm:$0xff]
    %v378 = vld [vmem:[%s365 + $0x60] sm:$0xff]
    %v379 = vld [vmem:[%s365 + $0x68] sm:$0xff]
    %v380 = vld [vmem:[%s365 + $0x70] sm:$0xff]
    %v381 = vld [vmem:[%s365 + $0x78] sm:$0xff]
    %382 = vmatprep.subr.mxu0 0.0
    %383 = vmatpush1.msra.mxu0 %v366
    %384 = vmatprep.subr.mxu0 0.0
    %385 = vmatpush1.msra.mxu0 %v367
    %386 = vmatprep.subr.mxu0 0.0
    %387 = vmatpush1.msra.mxu0 %v368
    %388 = vmatprep.subr.mxu0 0.0
    %389 = vmatpush1.msra.mxu0 %v369
    %390 = vmatprep.subr.mxu0 0.0
    %391 = vmatpush1.msra.mxu0 %v370
    %392 = vmatprep.subr.mxu0 0.0
    %393 = vmatpush1.msra.mxu0 %v371
    %394 = vmatprep.subr.mxu0 0.0
    %395 = vmatpush1.msra.mxu0 %v372
    %396 = vmatprep.subr.mxu0 0.0
    %397 = vmatpush1.msra.mxu0 %v373
    %398 = vmatprep.subr.mxu0 0.0
    %399 = vmatpush1.msra.mxu0 %v374
    %400 = vmatprep.subr.mxu0 0.0
    %401 = vmatpush1.msra.mxu0 %v375
    %402 = vmatprep.subr.mxu0 0.0
    %403 = vmatpush1.msra.mxu0 %v376
    %404 = vmatprep.subr.mxu0 0.0
    %405 = vmatpush1.msra.mxu0 %v377
    %406 = vmatprep.subr.mxu0 0.0
    %407 = vmatpush1.msra.mxu0 %v378
    %408 = vmatprep.subr.mxu0 0.0
    %409 = vmatpush1.msra.mxu0 %v379
    %410 = vmatprep.subr.mxu0 0.0
    %411 = vmatpush1.msra.mxu0 %v380
    %412 = vmatprep.subr.mxu0 0.0
    %413 = vmatpush1.msra.mxu0 %v381
    %414 = vmatprep.subr.mxu0 0.0
    %415 = vmatpush1.msra.mxu0 0.0
    %416 = vmatprep.subr.mxu0 0.0
    %417 = vmatpush1.msra.mxu0 0.0
    %418 = vmatprep.subr.mxu0 0.0
    %419 = vmatpush1.msra.mxu0 0.0
    %420 = vmatprep.subr.mxu0 0.0
    %421 = vmatpush1.msra.mxu0 0.0
    %422 = vmatprep.subr.mxu0 0.0
    %423 = vmatpush1.msra.mxu0 0.0
    %424 = vmatprep.subr.mxu0 0.0
    %425 = vmatpush1.msra.mxu0 0.0
    %426 = vmatprep.subr.mxu0 0.0
    %427 = vmatpush1.msra.mxu0 0.0
    %428 = vmatprep.subr.mxu0 0.0
    %429 = vmatpush1.msra.mxu0 0.0
    %430 = vmatprep.subr.mxu0 0.0
    %431 = vmatpush1.msra.mxu0 0.0
    %432 = vmatprep.subr.mxu0 0.0
    %433 = vmatpush1.msra.mxu0 0.0
    %434 = vmatprep.subr.mxu0 0.0
    %435 = vmatpush1.msra.mxu0 0.0
    %436 = vmatprep.subr.mxu0 0.0
    %437 = vmatpush1.msra.mxu0 0.0
    %438 = vmatprep.subr.mxu0 0.0
    %439 = vmatpush1.msra.mxu0 0.0
    %440 = vmatprep.subr.mxu0 0.0
    %441 = vmatpush1.msra.mxu0 0.0
    %442 = vmatprep.subr.mxu0 0.0
    %443 = vmatpush1.msra.mxu0 0.0
    %444 = vmatprep.subr.mxu0 0.0
    %445 = vmatpush1.msra.mxu0 0.0
    %446 = vmatprep.mubr.f32.mxu0 0.0
    %447 = vmatmul.mubr.f32.gmra.mrb[0].mxu0 %v364
    %v448 = vpop.f32.mrb[0].mxu0
    %v449 = vadd.f32 0.0, %v448
    %v450 = vpop.f32.mrb[0].mxu0
    %451 = vdwg.mxu0
    %v452 = vadd.f32 %v358, %v449
    %453 = vset.pattern.permute.xlu0 4
    %454 = vperm.xlu0 %453, %v77
    %v455 = vpop.permute.xlu0 %454
    %vm456 = vcmp.eq.s32.totalorder %v79, %v455
    %v457 = vsel %vm456, 1, 0
    %v458 = vcvt.s32.f32 %v457
    %s459 = scalar_lea.vmem [#allocation5], 512
    %v460 = vld [vmem:[%s459] sm:$0xff]
    %v461 = vld [vmem:[%s459 + $0x8] sm:$0xff]
    %v462 = vld [vmem:[%s459 + $0x10] sm:$0xff]
    %v463 = vld [vmem:[%s459 + $0x18] sm:$0xff]
    %v464 = vld [vmem:[%s459 + $0x20] sm:$0xff]
    %v465 = vld [vmem:[%s459 + $0x28] sm:$0xff]
    %v466 = vld [vmem:[%s459 + $0x30] sm:$0xff]
    %v467 = vld [vmem:[%s459 + $0x38] sm:$0xff]
    %v468 = vld [vmem:[%s459 + $0x40] sm:$0xff]
    %v469 = vld [vmem:[%s459 + $0x48] sm:$0xff]
    %v470 = vld [vmem:[%s459 + $0x50] sm:$0xff]
    %v471 = vld [vmem:[%s459 + $0x58] sm:$0xff]
    %v472 = vld [vmem:[%s459 + $0x60] sm:$0xff]
    %v473 = vld [vmem:[%s459 + $0x68] sm:$0xff]
    %v474 = vld [vmem:[%s459 + $0x70] sm:$0xff]
    %v475 = vld [vmem:[%s459 + $0x78] sm:$0xff]
    %476 = vmatprep.subr.mxu0 0.0
    %477 = vmatpush1.msra.mxu0 %v460
    %478 = vmatprep.subr.mxu0 0.0
    %479 = vmatpush1.msra.mxu0 %v461
    %480 = vmatprep.subr.mxu0 0.0
    %481 = vmatpush1.msra.mxu0 %v462
    %482 = vmatprep.subr.mxu0 0.0
    %483 = vmatpush1.msra.mxu0 %v463
    %484 = vmatprep.subr.mxu0 0.0
    %485 = vmatpush1.msra.mxu0 %v464
    %486 = vmatprep.subr.mxu0 0.0
    %487 = vmatpush1.msra.mxu0 %v465
    %488 = vmatprep.subr.mxu0 0.0
    %489 = vmatpush1.msra.mxu0 %v466
    %490 = vmatprep.subr.mxu0 0.0
    %491 = vmatpush1.msra.mxu0 %v467
    %492 = vmatprep.subr.mxu0 0.0
    %493 = vmatpush1.msra.mxu0 %v468
    %494 = vmatprep.subr.mxu0 0.0
    %495 = vmatpush1.msra.mxu0 %v469
    %496 = vmatprep.subr.mxu0 0.0
    %497 = vmatpush1.msra.mxu0 %v470
    %498 = vmatprep.subr.mxu0 0.0
    %499 = vmatpush1.msra.mxu0 %v471
    %500 = vmatprep.subr.mxu0 0.0
    %501 = vmatpush1.msra.mxu0 %v472
    %502 = vmatprep.subr.mxu0 0.0
    %503 = vmatpush1.msra.mxu0 %v473
    %504 = vmatprep.subr.mxu0 0.0
    %505 = vmatpush1.msra.mxu0 %v474
    %506 = vmatprep.subr.mxu0 0.0
    %507 = vmatpush1.msra.mxu0 %v475
    %508 = vmatprep.subr.mxu0 0.0
    %509 = vmatpush1.msra.mxu0 0.0
    %510 = vmatprep.subr.mxu0 0.0
    %511 = vmatpush1.msra.mxu0 0.0
    %512 = vmatprep.subr.mxu0 0.0
    %513 = vmatpush1.msra.mxu0 0.0
    %514 = vmatprep.subr.mxu0 0.0
    %515 = vmatpush1.msra.mxu0 0.0
    %516 = vmatprep.subr.mxu0 0.0
    %517 = vmatpush1.msra.mxu0 0.0
    %518 = vmatprep.subr.mxu0 0.0
    %519 = vmatpush1.msra.mxu0 0.0
    %520 = vmatprep.subr.mxu0 0.0
    %521 = vmatpush1.msra.mxu0 0.0
    %522 = vmatprep.subr.mxu0 0.0
    %523 = vmatpush1.msra.mxu0 0.0
    %524 = vmatprep.subr.mxu0 0.0
    %525 = vmatpush1.msra.mxu0 0.0
    %526 = vmatprep.subr.mxu0 0.0
    %527 = vmatpush1.msra.mxu0 0.0
    %528 = vmatprep.subr.mxu0 0.0
    %529 = vmatpush1.msra.mxu0 0.0
    %530 = vmatprep.subr.mxu0 0.0
    %531 = vmatpush1.msra.mxu0 0.0
    %532 = vmatprep.subr.mxu0 0.0
    %533 = vmatpush1.msra.mxu0 0.0
    %534 = vmatprep.subr.mxu0 0.0
    %535 = vmatpush1.msra.mxu0 0.0
    %536 = vmatprep.subr.mxu0 0.0
    %537 = vmatpush1.msra.mxu0 0.0
    %538 = vmatprep.subr.mxu0 0.0
    %539 = vmatpush1.msra.mxu0 0.0
    %540 = vmatprep.mubr.f32.mxu0 0.0
    %541 = vmatmul.mubr.f32.gmra.mrb[0].mxu0 %v458
    %v542 = vpop.f32.mrb[0].mxu0
    %v543 = vadd.f32 0.0, %v542
    %v544 = vpop.f32.mrb[0].mxu0
    %545 = vdwg.mxu0
    %v546 = vadd.f32 %v452, %v543
    %v547 = vld [vmem:[#allocation7] sm:$0xff]
    %v548 = vld [vmem:[#allocation7 + $0x8] sm:$0xff]
    %v549 = vld [vmem:[#allocation7 + $0x10] sm:$0xff]
    %v550 = vld [vmem:[#allocation7 + $0x18] sm:$0xff]
    %v551 = vld [vmem:[#allocation7 + $0x20] sm:$0xff]
    %v552 = vld [vmem:[#allocation7 + $0x28] sm:$0xff]
    %v553 = vld [vmem:[#allocation7 + $0x30] sm:$0xff]
    %v554 = vld [vmem:[#allocation7 + $0x38] sm:$0xff]
    %v555 = vld [vmem:[#allocation7 + $0x40] sm:$0xff]
    %v556 = vld [vmem:[#allocation7 + $0x48] sm:$0xff]
    %v557 = vld [vmem:[#allocation7 + $0x50] sm:$0xff]
    %v558 = vld [vmem:[#allocation7 + $0x58] sm:$0xff]
    %v559 = vld [vmem:[#allocation7 + $0x60] sm:$0xff]
    %v560 = vld [vmem:[#allocation7 + $0x68] sm:$0xff]
    %v561 = vld [vmem:[#allocation7 + $0x70] sm:$0xff]
    %v562 = vld [vmem:[#allocation7 + $0x78] sm:$0xff]
    %v563 = vld [vmem:[%s3] sm:$0x1]
    %v565 = vlaneseq
    %v566 = vshrl.u32 %v565, 7
    %v567 = vsub.s32 0, %v566
    %v568 = vrot.slane %v563, %v567
    %570 = vmatprep.subr.mxu0 0.0
    %571 = vmatpush1.msra.mxu0 %v547
    %572 = vmatprep.subr.mxu0 0.0
    %573 = vmatpush1.msra.mxu0 %v548
    %574 = vmatprep.subr.mxu0 0.0
    %575 = vmatpush1.msra.mxu0 %v549
    %576 = vmatprep.subr.mxu0 0.0
    %577 = vmatpush1.msra.mxu0 %v550
    %578 = vmatprep.subr.mxu0 0.0
    %579 = vmatpush1.msra.mxu0 %v551
    %580 = vmatprep.subr.mxu0 0.0
    %581 = vmatpush1.msra.mxu0 %v552
    %582 = vmatprep.subr.mxu0 0.0
    %583 = vmatpush1.msra.mxu0 %v553
    %584 = vmatprep.subr.mxu0 0.0
    %585 = vmatpush1.msra.mxu0 %v554
    %586 = vmatprep.subr.mxu0 0.0
    %587 = vmatpush1.msra.mxu0 %v555
    %588 = vmatprep.subr.mxu0 0.0
    %589 = vmatpush1.msra.mxu0 %v556
    %590 = vmatprep.subr.mxu0 0.0
    %591 = vmatpush1.msra.mxu0 %v557
    %592 = vmatprep.subr.mxu0 0.0
    %593 = vmatpush1.msra.mxu0 %v558
    %594 = vmatprep.subr.mxu0 0.0
    %595 = vmatpush1.msra.mxu0 %v559
    %596 = vmatprep.subr.mxu0 0.0
    %597 = vmatpush1.msra.mxu0 %v560
    %598 = vmatprep.subr.mxu0 0.0
    %599 = vmatpush1.msra.mxu0 %v561
    %600 = vmatprep.subr.mxu0 0.0
    %601 = vmatpush1.msra.mxu0 %v562
    %602 = vmatprep.subr.mxu0 0.0
    %603 = vmatpush1.msra.mxu0 0.0
    %604 = vmatprep.subr.mxu0 0.0
    %605 = vmatpush1.msra.mxu0 0.0
    %606 = vmatprep.subr.mxu0 0.0
    %607 = vmatpush1.msra.mxu0 0.0
    %608 = vmatprep.subr.mxu0 0.0
    %609 = vmatpush1.msra.mxu0 0.0
    %610 = vmatprep.subr.mxu0 0.0
    %611 = vmatpush1.msra.mxu0 0.0
    %612 = vmatprep.subr.mxu0 0.0
    %613 = vmatpush1.msra.mxu0 0.0
    %614 = vmatprep.subr.mxu0 0.0
    %615 = vmatpush1.msra.mxu0 0.0
    %616 = vmatprep.subr.mxu0 0.0
    %617 = vmatpush1.msra.mxu0 0.0
    %618 = vmatprep.subr.mxu0 0.0
    %619 = vmatpush1.msra.mxu0 0.0
    %620 = vmatprep.subr.mxu0 0.0
    %621 = vmatpush1.msra.mxu0 0.0
    %622 = vmatprep.subr.mxu0 0.0
    %623 = vmatpush1.msra.mxu0 0.0
    %624 = vmatprep.subr.mxu0 0.0
    %625 = vmatpush1.msra.mxu0 0.0
    %626 = vmatprep.subr.mxu0 0.0
    %627 = vmatpush1.msra.mxu0 0.0
    %628 = vmatprep.subr.mxu0 0.0
    %629 = vmatpush1.msra.mxu0 0.0
    %630 = vmatprep.subr.mxu0 0.0
    %631 = vmatpush1.msra.mxu0 0.0
    %632 = vmatprep.subr.mxu0 0.0
    %633 = vmatpush1.msra.mxu0 0.0
    %634 = vmatprep.mubr.f32.mxu0 0.0
    %635 = vmatmul.mubr.f32.gmra.mrb[0].mxu0 %v546
    %v636 = vpop.f32.mrb[0].mxu0
    %v637 = vadd.f32 %v568, %v636
    %v638 = vpop.f32.mrb[0].mxu0
    %639 = vdwg.mxu0
    %v640 = vtanh.pop %v637
    %v641 = vld [vmem:[#allocation8] sm:$0xff]
    %v642 = vld [vmem:[#allocation8 + $0x8] sm:$0xff]
    %v643 = vld [vmem:[#allocation8 + $0x10] sm:$0xff]
    %v644 = vld [vmem:[#allocation8 + $0x18] sm:$0xff]
    %v645 = vld [vmem:[#allocation8 + $0x20] sm:$0xff]
    %v646 = vld [vmem:[#allocation8 + $0x28] sm:$0xff]
    %v647 = vld [vmem:[#allocation8 + $0x30] sm:$0xff]
    %v648 = vld [vmem:[#allocation8 + $0x38] sm:$0xff]
    %v649 = vld [vmem:[#allocation8 + $0x40] sm:$0xff]
    %v650 = vld [vmem:[#allocation8 + $0x48] sm:$0xff]
    %v651 = vld [vmem:[#allocation8 + $0x50] sm:$0xff]
    %v652 = vld [vmem:[#allocation8 + $0x58] sm:$0xff]
    %v653 = vld [vmem:[#allocation8 + $0x60] sm:$0xff]
    %v654 = vld [vmem:[#allocation8 + $0x68] sm:$0xff]
    %v655 = vld [vmem:[#allocation8 + $0x70] sm:$0xff]
    %v656 = vld [vmem:[#allocation8 + $0x78] sm:$0xff]
    %v657 = vld [vmem:[%s5] sm:$0x1]
    %v659 = vlaneseq
    %v660 = vshrl.u32 %v659, 7
    %v661 = vsub.s32 0, %v660
    %v662 = vrot.slane %v657, %v661
    %664 = vmatprep.subr.mxu0 0.0
    %665 = vmatpush1.msra.mxu0 %v641
    %666 = vmatprep.subr.mxu0 0.0
    %667 = vmatpush1.msra.mxu0 %v642
    %668 = vmatprep.subr.mxu0 0.0
    %669 = vmatpush1.msra.mxu0 %v643
    %670 = vmatprep.subr.mxu0 0.0
    %671 = vmatpush1.msra.mxu0 %v644
    %672 = vmatprep.subr.mxu0 0.0
    %673 = vmatpush1.msra.mxu0 %v645
    %674 = vmatprep.subr.mxu0 0.0
    %675 = vmatpush1.msra.mxu0 %v646
    %676 = vmatprep.subr.mxu0 0.0
    %677 = vmatpush1.msra.mxu0 %v647
    %678 = vmatprep.subr.mxu0 0.0
    %679 = vmatpush1.msra.mxu0 %v648
    %680 = vmatprep.subr.mxu0 0.0
    %681 = vmatpush1.msra.mxu0 %v649
    %682 = vmatprep.subr.mxu0 0.0
    %683 = vmatpush1.msra.mxu0 %v650
    %684 = vmatprep.subr.mxu0 0.0
    %685 = vmatpush1.msra.mxu0 %v651
    %686 = vmatprep.subr.mxu0 0.0
    %687 = vmatpush1.msra.mxu0 %v652
    %688 = vmatprep.subr.mxu0 0.0
    %689 = vmatpush1.msra.mxu0 %v653
    %690 = vmatprep.subr.mxu0 0.0
    %691 = vmatpush1.msra.mxu0 %v654
    %692 = vmatprep.subr.mxu0 0.0
    %693 = vmatpush1.msra.mxu0 %v655
    %694 = vmatprep.subr.mxu0 0.0
    %695 = vmatpush1.msra.mxu0 %v656
    %696 = vmatprep.subr.mxu0 0.0
    %697 = vmatpush1.msra.mxu0 0.0
    %698 = vmatprep.subr.mxu0 0.0
    %699 = vmatpush1.msra.mxu0 0.0
    %700 = vmatprep.subr.mxu0 0.0
    %701 = vmatpush1.msra.mxu0 0.0
    %702 = vmatprep.subr.mxu0 0.0
    %703 = vmatpush1.msra.mxu0 0.0
    %704 = vmatprep.subr.mxu0 0.0
    %705 = vmatpush1.msra.mxu0 0.0
    %706 = vmatprep.subr.mxu0 0.0
    %707 = vmatpush1.msra.mxu0 0.0
    %708 = vmatprep.subr.mxu0 0.0
    %709 = vmatpush1.msra.mxu0 0.0
    %710 = vmatprep.subr.mxu0 0.0
    %711 = vmatpush1.msra.mxu0 0.0
    %712 = vmatprep.subr.mxu0 0.0
    %713 = vmatpush1.msra.mxu0 0.0
    %714 = vmatprep.subr.mxu0 0.0
    %715 = vmatpush1.msra.mxu0 0.0
    %716 = vmatprep.subr.mxu0 0.0
    %717 = vmatpush1.msra.mxu0 0.0
    %718 = vmatprep.subr.mxu0 0.0
    %719 = vmatpush1.msra.mxu0 0.0
    %720 = vmatprep.subr.mxu0 0.0
    %721 = vmatpush1.msra.mxu0 0.0
    %722 = vmatprep.subr.mxu0 0.0
    %723 = vmatpush1.msra.mxu0 0.0
    %724 = vmatprep.subr.mxu0 0.0
    %725 = vmatpush1.msra.mxu0 0.0
    %726 = vmatprep.subr.mxu0 0.0
    %727 = vmatpush1.msra.mxu0 0.0
    %728 = vmatprep.mubr.f32.mxu0 0.0
    %729 = vmatmul.mubr.f32.gmra.mrb[0].mxu0 %v640
    %v730 = vpop.f32.mrb[0].mxu0
    %v731 = vadd.f32 %v662, %v730
    %v732 = vpop.f32.mrb[0].mxu0
    %733 = vdwg.mxu0
    %734 = vmax.xlane.f32.xlu0 %v731
    %v735 = vpop.xlane.xlu0 %734
    %v736 = vsub.f32 %v731, %v735
    %v737 = vmul.f32 %v736, 1.442695
    %v738 = vpow.pop %v737
    %739 = vadd.xlane.f32.xlu0 %v738
    %v740 = vpop.xlane.xlu0 %739
    %v741 = vrcp.pop %v740
    %v742 = vmul.f32 %v738, %v741
    %743 = vst [vmem:[#allocation10] sm:$0xff] %v742
    // Predicated region
    $region42: #{window_base_tagger_forward.1} parent=1 // pred_check
      _
    $region43: #{window_base_tagger_forward.1} parent=1 // pred_check_branch
      %745 = sbr.rel (0) target = $region45
    $region44: #{window_base_tagger_forward.1} parent=1 // pred_region
      %s747 = ssub.s32 128, 128
      %748 = vsyncadd [#allocation4], %s747
      %s750 = sshll.u32 [#allocation10], 4
      %s751 = int_to_ptr.vmem [resolvable:$true] %s750
      %753 = dma.vmem_to_hbm [thread:$0]  %s751, 128, %s6, [#allocation4]
    $region45: #{window_base_tagger_forward.1} parent=1 // pred_fallthru
      _
    // Predicated region
    $region46: #{window_base_tagger_forward.1} parent=1 // pred_check
      _
    $region47: #{window_base_tagger_forward.1} parent=1 // pred_check_branch
      %755 = sbr.rel (0) target = $region49
    $region48: #{window_base_tagger_forward.1} parent=1 // pred_region
      %756 = dma.done [#allocation4], 128
    $region49: #{window_base_tagger_forward.1} parent=1 // pred_fallthru
      _
    %757 = vsyncpa [#allocation3], 1
    %758 = vsyncpa [#allocation6], 1
    %759 = vsyncpa [#allocation9], 1
    %760 = vsyncpa [#allocation4], 1

</llo_original>
